<compile_context>
chip_gen: v6e
topology: v6e:2x2x1
jax: 0.10.0
libtpu: 0.0.40
codegen_flags: <defaults>
</compile_context>

<pallas_src>
import functools

import jax
import jax.numpy as jnp
from jax.experimental import pallas as pl
from jax.experimental.pallas import tpu as pltpu

EPS = 1e-6
LANE = 128


def _round_up(n, m):
    return ((n + m - 1) // m) * m


def _pad_axis(a, axis, size):
    if a.shape[axis] == size:
        return a
    pads = [(0, 0)] * a.ndim
    pads[axis] = (0, size - a.shape[axis])
    return jnp.pad(a, pads)


# ----------------------------- stage 1 --------------------------------------
# Stats-only pass for GLN1: 1x1 conv (matmul) + PReLU, per-tile per-channel
# partial sum / sum-of-squares.  h1 is NOT materialized (recomputed in stage 2).
def _stage1_kernel(a1_ref, x_ref, w1_ref, b1_ref, ssum_ref, ssq_ref, *, T, TT):
    t = pl.program_id(1)
    h = jnp.dot(x_ref[0], w1_ref[...],
                preferred_element_type=jnp.float32) + b1_ref[...]
    a1 = a1_ref[0]
    h = jnp.where(h >= 0, h, a1 * h)                       # PReLU
    # Exclude padded tail rows (global index >= T) from the statistics.
    row = jax.lax.broadcasted_iota(jnp.int32, (TT, 1), 0)
    h = jnp.where(t * TT + row < T, h, 0.0)
    ssum_ref[...] = jnp.sum(h, axis=0, keepdims=True).reshape(ssum_ref.shape)
    ssq_ref[...] = jnp.sum(h * h, axis=0, keepdims=True).reshape(ssq_ref.shape)


# ----------------------------- stage 2 --------------------------------------
# Recompute 1x1 conv + PReLU from x (current tile + small halo slabs), apply
# GLN1, dilated depthwise conv ("same" zero padding) + PReLU, write h2
# (act_dtype) and per-tile GLN2 partial stats.
def _stage2_kernel(stats1_ref, a1_ref, a2_ref,
                   xc_ref, xlo_ref, xhi_ref,
                   w1_ref, b1_ref, g1_ref, be1_ref, dww_ref, dwb_ref,
                   h2_ref, ssum_ref, ssq_ref,
                   buf_ref,
                   *, ksize, dilation, pad, halo, T, TT):
    b = pl.program_id(0)
    t = pl.program_id(1)
    Cm = buf_ref.shape[1]

    mean1 = stats1_ref[b, 0]
    rstd1 = stats1_ref[b, 1]
    a1 = a1_ref[0]
    a2 = a2_ref[0]
    w1 = w1_ref[...]
    b1 = b1_ref[...]
    g1 = g1_ref[...]
    be1 = be1_ref[...]
    t0 = t * TT                                            # first global row

    def gln1_rows(xs, start, nrows):
        # 1x1 conv + PReLU (recomputed), GLN1 apply, zero rows outside [0, T)
        # (these zeros are exactly the conv's "same" zero padding).
        h = jnp.dot(xs, w1, preferred_element_type=jnp.float32) + b1
        h = jnp.where(h >= 0, h, a1 * h)
        h = g1 * ((h - mean1) * rstd1) + be1
        row = jax.lax.broadcasted_iota(jnp.int32, (nrows, 1), 0)
        gidx = start + row
        return jnp.where((gidx >= 0) & (gidx < T), h, 0.0)

    # Fill the halo'd conv-input scratch with 8-aligned ref stores.
    buf_ref[0:halo, :] = gln1_rows(xlo_ref[0, 0], t0 - halo, halo)
    buf_ref[halo:halo + TT, :] = gln1_rows(xc_ref[0], t0, TT)
    buf_ref[halo + TT:halo + TT + halo, :] = gln1_rows(xhi_ref[0, 0],
                                                       t0 + TT, halo)

    # Dilated depthwise conv: K static slices of the scratch + VPU FMA.
    dw = dww_ref[...]                                      # (K, Cm)
    acc = jnp.zeros((TT, Cm), jnp.float32)
    for k in range(ksize):
        off = halo - pad + k * dilation                    # static offset
        acc = acc + buf_ref[off:off + TT, :] * dw[k:k + 1, :]
    h = acc + dwb_ref[...]
    h = jnp.where(h >= 0, h, a2 * h)                       # PReLU
    h2_ref[0] = h.astype(h2_ref.dtype)

    # GLN2 per-tile per-channel partial stats (padded tail rows excluded).
    row = jax.lax.broadcasted_iota(jnp.int32, (TT, 1), 0)
    hm = jnp.where(t0 + row < T, h, 0.0)
    ssum_ref[...] = jnp.sum(hm, axis=0, keepdims=True).reshape(ssum_ref.shape)
    ssq_ref[...] = jnp.sum(hm * hm, axis=0, keepdims=True).reshape(ssq_ref.shape)


# ----------------------------- stage 3 --------------------------------------
# GLN2 apply + final 1x1 conv (matmul).
def _stage3_kernel(stats2_ref, h2_ref, g2_ref, be2_ref, w3_ref, b3_ref, o_ref,
                   *, mm_dtype):
    b = pl.program_id(0)
    mean2 = stats2_ref[b, 0]
    rstd2 = stats2_ref[b, 1]
    h = h2_ref[0].astype(jnp.float32)
    h = g2_ref[...] * ((h - mean2) * rstd2) + be2_ref[...]
    out = jnp.dot(h.astype(mm_dtype), w3_ref[...],
                  preferred_element_type=jnp.float32) + b3_ref[...]
    o_ref[0] = out.astype(o_ref.dtype)


# ----------------------------- wrapper --------------------------------------
def tcn_block(x, params, *, ksize, dilation, time_tile=512,
              matmul_dtype=jnp.bfloat16, act_dtype=jnp.bfloat16,
              vmem_limit_bytes=48 * 1024 * 1024):
    """x: (B, T, Cin) float32 (channels-last) -> (B, T, Cout) float32."""
    assert ksize % 2 == 1, "PyTorch 'same' semantics here assume odd kernel size"
    B, T, Cin = x.shape
    Cmid = params["w1"].shape[1]
    Cout = params["w3"].shape[1]
    pad = dilation * (ksize - 1) // 2

    HALO = max(8, _round_up(pad, 8))                    # halo rows, 8-aligned
    TT = _round_up(min(time_tile, max(T, 8)), 8)        # bounded time tile
    TT = max(TT, HALO)                                  # halo fits in one tile
    nT = -(-T // TT)
    T_pad = nT * TT

    Ci = _round_up(Cin, LANE)
    Cm = _round_up(Cmid, LANE)
    Co = _round_up(Cout, LANE)

    f32 = jnp.float32
    # Pad channels / time, cast the MXU operands ONCE in the wrapper.
    xp = _pad_axis(_pad_axis(x.astype(f32), 2, Ci), 1, T_pad).astype(matmul_dtype)
    # Small per-tile halo slabs (HALO rows before / after each tile) so stage 2
    # streams each x row ~once instead of reading three full neighboring tiles.
    xr = xp.reshape(B, nT, TT, Ci)
    zeros_h = jnp.zeros((B, 1, HALO, Ci), xp.dtype)
    x_lo = jnp.concatenate([zeros_h, xr[:, :-1, TT - HALO:, :]], axis=1)
    x_hi = jnp.concatenate([xr[:, 1:, :HALO, :], zeros_h], axis=1)

    w1 = _pad_axis(_pad_axis(params["w1"].astype(f32), 0, Ci), 1, Cm).astype(matmul_dtype)
    b1 = _pad_axis(params["b1"].astype(f32), 1, Cm)
    g1 = _pad_axis(params["g1"].astype(f32), 1, Cm)
    be1 = _pad_axis(params["be1"].astype(f32), 1, Cm)
    dww = _pad_axis(params["dww"].astype(f32), 1, Cm)
    dwb = _pad_axis(params["dwb"].astype(f32), 1, Cm)
    g2 = _pad_axis(params["g2"].astype(f32), 1, Cm)
    be2 = _pad_axis(params["be2"].astype(f32), 1, Cm)
    w3 = _pad_axis(_pad_axis(params["w3"].astype(f32), 0, Cm), 1, Co).astype(matmul_dtype)
    b3 = _pad_axis(params["b3"].astype(f32), 1, Co)
    a1 = jnp.reshape(params["a1"], (1,)).astype(f32)
    a2 = jnp.reshape(params["a2"], (1,)).astype(f32)

    smem_spec = pl.BlockSpec(memory_space=pltpu.MemorySpace.SMEM)
    cparams = pltpu.CompilerParams(
        dimension_semantics=("parallel", "parallel"),
        vmem_limit_bytes=vmem_limit_bytes)

    # ---- stage 1: GLN1 stats only (h1 recomputed later, never written) ----
    s1, q1 = pl.pallas_call(
        functools.partial(_stage1_kernel, T=T, TT=TT),
        out_shape=(jax.ShapeDtypeStruct((B, nT, 1, Cm), f32),
                   jax.ShapeDtypeStruct((B, nT, 1, Cm), f32)),
        grid_spec=pltpu.PrefetchScalarGridSpec(
            num_scalar_prefetch=0,
            grid=(B, nT),
            in_specs=[
                smem_spec,                                          # a1
                pl.BlockSpec((1, TT, Ci), lambda b, t: (b, t, 0)),  # x tile
                pl.BlockSpec((Ci, Cm), lambda b, t: (0, 0)),        # w1
                pl.BlockSpec((1, Cm), lambda b, t: (0, 0)),         # b1
            ],
            out_specs=[
                pl.BlockSpec((1, 1, 1, Cm), lambda b, t: (b, t, 0, 0)),
                pl.BlockSpec((1, 1, 1, Cm), lambda b, t: (b, t, 0, 0)),
            ],
        ),
        compiler_params=cparams,
    )(a1, xp, w1, b1)

    # GLN divisor uses the REAL element count (padded channels/rows are zero
    # in the sums).  TODO(synk): E[x^2]-mean^2 in f32 can lose precision for
    # very long sequences; switch to shifted/Welford partials if that bites.
    n_elem = float(T * Cmid)
    mean1 = jnp.sum(s1, axis=(1, 2, 3)) / n_elem
    var1 = jnp.maximum(jnp.sum(q1, axis=(1, 2, 3)) / n_elem - mean1 * mean1, 0.0)
    stats1 = jnp.stack([mean1, jax.lax.rsqrt(var1 + EPS)], axis=1)   # (B, 2)

    # ---- stage 2: recompute + GLN1 apply + depthwise conv + PReLU + stats ----
    h2, s2, q2 = pl.pallas_call(
        functools.partial(_stage2_kernel, ksize=ksize, dilation=dilation,
                          pad=pad, halo=HALO, T=T, TT=TT),
        out_shape=(jax.ShapeDtypeStruct((B, T_pad, Cm), act_dtype),
                   jax.ShapeDtypeStruct((B, nT, 1, Cm), f32),
                   jax.ShapeDtypeStruct((B, nT, 1, Cm), f32)),
        grid_spec=pltpu.PrefetchScalarGridSpec(
            num_scalar_prefetch=0,
            grid=(B, nT),
            in_specs=[
                smem_spec,                                          # stats1
                smem_spec,                                          # a1
                smem_spec,                                          # a2
                pl.BlockSpec((1, TT, Ci), lambda b, t: (b, t, 0)),  # x tile
                pl.BlockSpec((1, 1, HALO, Ci), lambda b, t: (b, t, 0, 0)),  # lo
                pl.BlockSpec((1, 1, HALO, Ci), lambda b, t: (b, t, 0, 0)),  # hi
                pl.BlockSpec((Ci, Cm), lambda b, t: (0, 0)),        # w1
                pl.BlockSpec((1, Cm), lambda b, t: (0, 0)),         # b1
                pl.BlockSpec((1, Cm), lambda b, t: (0, 0)),         # gamma1
                pl.BlockSpec((1, Cm), lambda b, t: (0, 0)),         # beta1
                pl.BlockSpec((ksize, Cm), lambda b, t: (0, 0)),     # dw weight
                pl.BlockSpec((1, Cm), lambda b, t: (0, 0)),         # dw bias
            ],
            out_specs=[
                pl.BlockSpec((1, TT, Cm), lambda b, t: (b, t, 0)),  # h2
                pl.BlockSpec((1, 1, 1, Cm), lambda b, t: (b, t, 0, 0)),
                pl.BlockSpec((1, 1, 1, Cm), lambda b, t: (b, t, 0, 0)),
            ],
            scratch_shapes=[pltpu.VMEM((TT + 2 * HALO, Cm), jnp.float32)],
        ),
        compiler_params=cparams,
    )(stats1, a1, a2, xp, x_lo, x_hi, w1, b1, g1, be1, dww, dwb)

    mean2 = jnp.sum(s2, axis=(1, 2, 3)) / n_elem
    var2 = jnp.maximum(jnp.sum(q2, axis=(1, 2, 3)) / n_elem - mean2 * mean2, 0.0)
    stats2 = jnp.stack([mean2, jax.lax.rsqrt(var2 + EPS)], axis=1)   # (B, 2)

    # ---- stage 3: GLN2 apply + final 1x1 conv ----
    out = pl.pallas_call(
        functools.partial(_stage3_kernel, mm_dtype=matmul_dtype),
        out_shape=jax.ShapeDtypeStruct((B, T_pad, Co), f32),
        grid_spec=pltpu.PrefetchScalarGridSpec(
            num_scalar_prefetch=0,
            grid=(B, nT),
            in_specs=[
                smem_spec,                                          # stats2
                pl.BlockSpec((1, TT, Cm), lambda b, t: (b, t, 0)),  # h2
                pl.BlockSpec((1, Cm), lambda b, t: (0, 0)),         # gamma2
                pl.BlockSpec((1, Cm), lambda b, t: (0, 0)),         # beta2
                pl.BlockSpec((Cm, Co), lambda b, t: (0, 0)),        # w3
                pl.BlockSpec((1, Co), lambda b, t: (0, 0)),         # b3
            ],
            out_specs=pl.BlockSpec((1, TT, Co), lambda b, t: (b, t, 0)),
        ),
        compiler_params=cparams,
    )(stats2, h2, g2, be2, w3, b3)

    if T_pad != T or Co != Cout:
        out = out[:, :T, :Cout]
    return out


def tcn_block_nct(x_nct, params, **kw):
    """Drop-in layout for the PyTorch module: (B, C, T) in / (B, C_out, T) out."""
    y = tcn_block(jnp.swapaxes(x_nct, 1, 2), params, **kw)
    return jnp.swapaxes(y, 1, 2)


# ----------------------------- reference ------------------------------------
def tcn_block_ref(x, p, *, ksize, dilation):
    """Pure-JAX f32 reference with identical semantics (channels-last)."""
    pad = dilation * (ksize - 1) // 2

    def gln(h, gamma, beta):
        mean = jnp.mean(h, axis=(1, 2), keepdims=True)
        var = jnp.mean((h - mean) ** 2, axis=(1, 2), keepdims=True)
        return gamma * ((h - mean) / jnp.sqrt(var + EPS)) + beta

    h = jnp.einsum("btc,cd->btd", x, p["w1"]) + p["b1"]
    h = jnp.where(h >= 0, h, p["a1"].reshape(1, 1, 1) * h)
    h = gln(h, p["g1"], p["be1"])
    B, T, C = h.shape
    hp = jnp.pad(h, ((0, 0), (pad, pad), (0, 0)))
    acc = jnp.zeros_like(h)
    for k in range(ksize):
        acc = acc + hp[:, k * dilation:k * dilation + T, :] * p["dww"][k][None, None, :]
    h = acc + p["dwb"]
    h = jnp.where(h >= 0, h, p["a2"].reshape(1, 1, 1) * h)
    h = gln(h, p["g2"], p["be2"])
    return jnp.einsum("btc,cd->btd", h, p["w3"]) + p["b3"]


def make_params(cin, cmid, cout, ksize, key):
    ks = jax.random.split(key, 8)
    f32 = jnp.float32
    return {
        # Conv1d(in=cin, out=cmid, k=1): weight stored as (cin, cmid)
        "w1": (0.1 * jax.random.normal(ks[0], (cin, cmid))).astype(f32),
        "b1": (0.1 * jax.random.normal(ks[1], (1, cmid))).astype(f32),
        "a1": jnp.full((1,), 0.25, f32),            # nn.PReLU default init
        "g1": (1.0 + 0.1 * jax.random.normal(ks[6], (1, cmid))).astype(f32),
        "be1": (0.1 * jax.random.normal(ks[7], (1, cmid))).astype(f32),
        # depthwise Conv1d weight (cmid, 1, k) stored as (k, cmid)
        "dww": (0.1 * jax.random.normal(ks[2], (ksize, cmid))).astype(f32),
        "dwb": (0.1 * jax.random.normal(ks[3], (1, cmid))).astype(f32),
        "a2": jnp.full((1,), 0.25, f32),
        "g2": jnp.ones((1, cmid), f32),
        "be2": jnp.zeros((1, cmid), f32),
        # Conv1d(in=cmid, out=cout, k=1): weight stored as (cmid, cout)
        "w3": (0.1 * jax.random.normal(ks[4], (cmid, cout))).astype(f32),
        "b3": (0.1 * jax.random.normal(ks[5], (1, cout))).astype(f32),
    }


if __name__ == "__main__":
    B, T = 2, 64
    CIN, CMID, COUT = 16, 32, 16
    KSIZE, DILATION = 3, 2

    key = jax.random.PRNGKey(0)
    kx, kp = jax.random.split(key)
    x = jax.random.normal(kx, (B, T, CIN), dtype=jnp.float32)   # channels-last
    params = make_params(CIN, CMID, COUT, KSIZE, kp)
    ref = tcn_block_ref(x, params, ksize=KSIZE, dilation=DILATION)

    # (1) f32 everywhere: tight comparison against the f32 reference.
    out = tcn_block(x, params, ksize=KSIZE, dilation=DILATION, time_tile=16,
                    matmul_dtype=jnp.float32, act_dtype=jnp.float32)
    out = jax.block_until_ready(out)
    assert out.shape == (B, T, COUT)
    err = float(jnp.max(jnp.abs(out - ref)))
    assert err < 5e-4, f"f32 mismatch vs reference: {err}"

    # (2) ragged sequence length (T not a multiple of the time tile):
    #     exercises the cdiv grid + tail-masking path.
    T2 = 56
    x2 = x[:, :T2, :]
    out2 = tcn_block(x2, params, ksize=KSIZE, dilation=DILATION, time_tile=16,
                     matmul_dtype=jnp.float32, act_dtype=jnp.float32)
    out2 = jax.block_until_ready(out2)
    ref2 = tcn_block_ref(x2, params, ksize=KSIZE, dilation=DILATION)
    assert out2.shape == (B, T2, COUT)
    err2 = float(jnp.max(jnp.abs(out2 - ref2)))
    assert err2 < 5e-4, f"f32 ragged-T mismatch vs reference: {err2}"

    # (3) default fast path: bf16 MXU operands + bf16 inter-stage activations
    #     (stats / GLN math stay f32), via the (B, C, T) module-layout wrapper.
    out_bf = tcn_block_nct(jnp.swapaxes(x, 1, 2), params,
                           ksize=KSIZE, dilation=DILATION, time_tile=16)
    out_bf = jax.block_until_ready(out_bf)
    err_bf = float(jnp.max(jnp.abs(jnp.swapaxes(out_bf, 1, 2) - ref)))
    assert err_bf < 1e-1, f"bf16 fast path mismatch vs f32 reference: {err_bf}"

    print("KERNEL_OK")
</pallas_src>

<mosaic_0001>
module attributes {stable_mosaic.version = 11 : i64} {
  func.func @_stage1_kernel(%arg0: i32, %arg1: i32, %arg2: memref<1xf32, #tpu.memory_space<smem>>, %arg3: memref<1x16x128xf32, #tpu.memory_space<vmem>>, %arg4: memref<128x128xf32, #tpu.memory_space<vmem>>, %arg5: memref<1x128xf32, #tpu.memory_space<vmem>>, %arg6: memref<1x1x1x128xf32, #tpu.memory_space<vmem>>, %arg7: memref<1x1x1x128xf32, #tpu.memory_space<vmem>>) attributes {dimension_semantics = [#tpu.dimension_semantics<parallel>, #tpu.dimension_semantics<parallel>], iteration_bounds = array<i64: 2, 4>, scalar_prefetch = 0 : i64, scratch_operands = 0 : i64, tpu.core_type = #tpu.core_type<tc>, window_params = [{transform_indices = @transform_0, window_bounds = array<i64: 1>}, {transform_indices = @transform_1, window_bounds = array<i64: 1, 16, 128>}, {pipeline_mode = #tpu.pipeline_mode<synchronous>, transform_indices = @transform_2, window_bounds = array<i64: 128, 128>}, {pipeline_mode = #tpu.pipeline_mode<synchronous>, transform_indices = @transform_3, window_bounds = array<i64: 1, 128>}, {transform_indices = @transform_4, window_bounds = array<i64: 1, 1, 1, 128>}, {transform_indices = @transform_5, window_bounds = array<i64: 1, 1, 1, 128>}]} {
    %c0 = arith.constant 0 : index
    %c0_0 = arith.constant 0 : index
    %c0_1 = arith.constant 0 : index
    %0 = vector.load %arg3[%c0, %c0_0, %c0_1] : memref<1x16x128xf32, #tpu.memory_space<vmem>>, vector<1x16x128xf32>
    %1 = vector.shape_cast %0 : vector<1x16x128xf32> to vector<16x128xf32>
    %c0_2 = arith.constant 0 : index
    %c0_3 = arith.constant 0 : index
    %2 = vector.load %arg4[%c0_2, %c0_3] : memref<128x128xf32, #tpu.memory_space<vmem>>, vector<128x128xf32>
    %cst = arith.constant dense<0.000000e+00> : vector<16x128xf32>
    %3 = tpu.matmul %1, %2, %cst {dimension_numbers = #tpu.dot_dimension_numbers<[1], [0], [0], [1], [0, 0, 1, 1], [], []>} : vector<16x128xf32>, vector<128x128xf32>, vector<16x128xf32> -> vector<16x128xf32>
    %c0_4 = arith.constant 0 : index
    %c0_5 = arith.constant 0 : index
    %4 = vector.load %arg5[%c0_4, %c0_5] : memref<1x128xf32, #tpu.memory_space<vmem>>, vector<1x128xf32>
    %5 = vector.broadcast %4 : vector<1x128xf32> to vector<16x128xf32>
    %6 = arith.addf %3, %5 : vector<16x128xf32>
    %c0_6 = arith.constant 0 : index
    %7 = memref.load %arg2[%c0_6] : memref<1xf32, #tpu.memory_space<smem>>
    %cst_7 = arith.constant 0.000000e+00 : f32
    %8 = vector.broadcast %cst_7 : f32 to vector<16x128xf32>
    %9 = arith.cmpf oge, %6, %8 : vector<16x128xf32>
    %10 = vector.broadcast %7 : f32 to vector<16x128xf32>
    %11 = arith.mulf %10, %6 : vector<16x128xf32>
    %12 = arith.select %9, %6, %11 : vector<16x128xi1>, vector<16x128xf32>
    %13 = tpu.iota {dimensions = array<i32: 0>} : vector<16x1xi32>
    %c16_i32 = arith.constant 16 : i32
    %14 = arith.muli %arg1, %c16_i32 : i32
    %15 = vector.broadcast %14 : i32 to vector<16x1xi32>
    %16 = arith.addi %15, %13 : vector<16x1xi32>
    %c64_i32 = arith.constant 64 : i32
    %17 = vector.broadcast %c64_i32 : i32 to vector<16x1xi32>
    %18 = arith.cmpi slt, %16, %17 : vector<16x1xi32>
    %cst_8 = arith.constant 0.000000e+00 : f32
    %19 = vector.shape_cast %18 : vector<16x1xi1> to vector<16x1xi1>
    %20 = vector.broadcast %19 : vector<16x1xi1> to vector<16x128xi1>
    %21 = vector.broadcast %cst_8 : f32 to vector<16x128xf32>
    %22 = arith.select %20, %12, %21 : vector<16x128xi1>, vector<16x128xf32>
    %cst_9 = arith.constant dense<0.000000e+00> : vector<128xf32>
    %23 = vector.multi_reduction <add>, %22, %cst_9 [0] : vector<16x128xf32> to vector<128xf32>
    %24 = vector.shape_cast %23 : vector<128xf32> to vector<1x128xf32>
    %25 = vector.shape_cast %24 : vector<1x128xf32> to vector<1x1x1x128xf32>
    %c0_10 = arith.constant 0 : index
    %c0_11 = arith.constant 0 : index
    %c0_12 = arith.constant 0 : index
    %c0_13 = arith.constant 0 : index
    %26 = vector.load %arg6[%c0_10, %c0_11, %c0_12, %c0_13] : memref<1x1x1x128xf32, #tpu.memory_space<vmem>>, vector<1x1x1x128xf32>
    tpu.vector_store %arg6[%c0_10, %c0_11, %c0_12, %c0_13], %25 {strides = array<i32>} : memref<1x1x1x128xf32, #tpu.memory_space<vmem>>, vector<1x1x1x128xf32>,
    %27 = arith.mulf %22, %22 : vector<16x128xf32>
    %cst_14 = arith.constant dense<0.000000e+00> : vector<128xf32>
    %28 = vector.multi_reduction <add>, %27, %cst_14 [0] : vector<16x128xf32> to vector<128xf32>
    %29 = vector.shape_cast %28 : vector<128xf32> to vector<1x128xf32>
    %30 = vector.shape_cast %29 : vector<1x128xf32> to vector<1x1x1x128xf32>
    %c0_15 = arith.constant 0 : index
    %c0_16 = arith.constant 0 : index
    %c0_17 = arith.constant 0 : index
    %c0_18 = arith.constant 0 : index
    %31 = vector.load %arg7[%c0_15, %c0_16, %c0_17, %c0_18] : memref<1x1x1x128xf32, #tpu.memory_space<vmem>>, vector<1x1x1x128xf32>
    tpu.vector_store %arg7[%c0_15, %c0_16, %c0_17, %c0_18], %30 {strides = array<i32>} : memref<1x1x1x128xf32, #tpu.memory_space<vmem>>, vector<1x1x1x128xf32>,
    return
  }
  func.func @transform_0(%arg0: i32, %arg1: i32) -> i32 {
    %c0_i32 = arith.constant 0 : i32
    %c0_i32_0 = arith.constant 0 : i32
    return %c0_i32 : i32
  }
  func.func @transform_1(%arg0: i32, %arg1: i32) -> (i32, i32, i32) {
    %c0_i32 = arith.constant 0 : i32
    %c0_i32_0 = arith.constant 0 : i32
    return %arg0, %arg1, %c0_i32 : i32, i32, i32
  }
  func.func @transform_2(%arg0: i32, %arg1: i32) -> (i32, i32) {
    %c0_i32 = arith.constant 0 : i32
    %c0_i32_0 = arith.constant 0 : i32
    %c0_i32_1 = arith.constant 0 : i32
    return %c0_i32, %c0_i32_0 : i32, i32
  }
  func.func @transform_3(%arg0: i32, %arg1: i32) -> (i32, i32) {
    %c0_i32 = arith.constant 0 : i32
    %c0_i32_0 = arith.constant 0 : i32
    %c0_i32_1 = arith.constant 0 : i32
    return %c0_i32, %c0_i32_0 : i32, i32
  }
  func.func @transform_4(%arg0: i32, %arg1: i32) -> (i32, i32, i32, i32) {
    %c0_i32 = arith.constant 0 : i32
    %c0_i32_0 = arith.constant 0 : i32
    %c0_i32_1 = arith.constant 0 : i32
    return %arg0, %arg1, %c0_i32, %c0_i32_0 : i32, i32, i32, i32
  }
  func.func @transform_5(%arg0: i32, %arg1: i32) -> (i32, i32, i32, i32) {
    %c0_i32 = arith.constant 0 : i32
    %c0_i32_0 = arith.constant 0 : i32
    %c0_i32_1 = arith.constant 0 : i32
    return %arg0, %arg1, %c0_i32, %c0_i32_0 : i32, i32, i32, i32
  }
}

</mosaic_0001>

<llo_original>
// kernel: tpu_custom_call.1
$region0: #{tpu_custom_call.1}
  #allocation0 [shape = 'u32[]', space=smem, size = 0x4, offset = 0x4, fixed_abs, tag = 'smem constant byte address 0x4 - core index']
  #allocation1 [shape = 'u32[144,128]{1,0:T(1,128)}', space=vmem, size = 0x12000, scoped, tag = 'internal scratch']
  #allocation2 [shape = 'f32[1]{0:T(128)S(6)}', space=smem, size = 0x200, scoped, tag = 'scoped memory for tpu_custom_call.1']
  %s0 = inlined_call_operand.<no memory space> [shape: f32[1], index: 0, kind: input, shape index: {}]
  %s1 = inlined_call_operand.hbm [shape: f32[2,64,128], index: 1, kind: input, shape index: {}]
  %s2 = inlined_call_operand.hbm [shape: f32[128,128], index: 2, kind: input, shape index: {}]
  %s3 = inlined_call_operand.vmem [shape: f32[1,128], index: 3, kind: input, shape index: {}]
  %s4 = inlined_call_operand.hbm [shape: f32[2,4,1,128], index: 4, kind: output, shape index: {0}]
  %s5 = inlined_call_operand.hbm [shape: f32[2,4,1,128], index: 5, kind: output, shape index: {1}]
  %6 = xla_tuple %s4, %s5
  %s7 = sld [smem:[#allocation0]]
  $region65: #{tpu_custom_call.1} parent=0
    _
  %s9 = ssub.s32 1, %s7
  %s10 = scalar_select 0, %s9, %s7
  %11 = sst [smem:[#allocation2]] %s0
  $region1: #{tpu_custom_call.1} parent=0
    #allocation3 [shape = 'u8[16384]{0}', space=vmem, size = 0x4000, scoped, tag = 'input window, operand 1']
    #allocation4 [shape = 's32[2]{0}', space=sflag, size = 0x8, scoped, tag = 'scoped memory for tpu_custom_call.1']
    #allocation5 [shape = 's32[2]{0}', space=sflag, size = 0x8, scoped, tag = 'scoped memory for tpu_custom_call.1']
    #allocation6 [shape = 'u8[65536]{0}', space=vmem, size = 0x10000, scoped, tag = 'input window, operand 2, single buffered']
    #allocation7 [shape = 's32[1]{0}', space=sflag, size = 0x4, scoped, tag = 'scoped memory for tpu_custom_call.1']
    #allocation8 [shape = 'u8[1024]{0}', space=vmem, size = 0x400, scoped, tag = 'output window, operand 0']
    #allocation9 [shape = 'u8[1024]{0}', space=vmem, size = 0x400, scoped, tag = 'output window, operand 1']
    #allocation10 [shape = 's32[2]{0}', space=sflag, size = 0x8, scoped, tag = 'scoped memory for tpu_custom_call.1']
    %12 = vsyncpa [#allocation4], 0
    %s13 = scalar_lea.sflag [#allocation4], 1
    %14 = vsyncpa %s13, 0
    %15 = vsyncpa [#allocation7], 0
    %16 = vsyncpa [#allocation5], 0
    %s17 = scalar_lea.sflag [#allocation5], 1
    %18 = vsyncpa %s17, 0
    %19 = vsyncpa [#allocation10], 0
    %s20 = scalar_lea.sflag [#allocation10], 1
    %21 = vsyncpa %s20, 0
    loop: start=0, step=1, limit=10
    $region2: #{tpu_custom_call.1} parent=1 // loop_pre_header
      _
    $region3: #{tpu_custom_call.1} parent=1 // loop_header
      %s23 = sphi 0, %s27
      %p24 = scmp.ge.s32.totalorder %s23, 10
      %s30 = sphi 0, %s42
      %s31 = sphi 0, %s38
      %s32 = sphi 0, %s30
      %s33 = sphi 0, %s31
      %s34 = sphi 0, %s32
      %s35 = sphi 0, %s33
      %s43 = sphi 0, %s43
      %s45 = sphi 0, %s43
      %s46 = sphi 0, %s45
      %s60 = sphi 0, %s46
      %s68 = sphi 0, %s70
      %s71 = sphi 0, %s68
      %s72 = sphi 0, %s71
      %s88 = sphi 0, %s72
      %s92 = sphi 0, %s92
      %s94 = sphi 0, %s92
      %s95 = sphi 0, %s94
      %s109 = sphi 0, %s95
      %s113 = sphi 0, %s113
      %s115 = sphi 0, %s113
      %s116 = sphi 0, %s115
      %s130 = sphi 0, %s116
      %s138 = sphi 0, %s140
      %s141 = sphi 0, %s138
      %s142 = sphi 0, %s141
      %s158 = sphi 0, %s142
      %s166 = sphi 0, %s168
      %s169 = sphi 0, %s166
      %s170 = sphi 0, %s169
      %s186 = sphi 0, %s170
    $region4: #{tpu_custom_call.1} parent=1 // loop_header_branch
      %26 = sbr.rel (%p24) target = $region8
    $region5: #{tpu_custom_call.1} parent=1 // loop_body
      %s28 = ssub.s32 %s23, 1
      %s29 = ssub.s32 %s23, 2
      %s36 = sadd.s32 1, %s31
      %p37 = scmp.ge.s32.totalorder %s36, 4
      %s38 = scalar_select %p37, 0, %s36
      %s39 = sadd.s32 1, %s30
      %s40 = scalar_select %p37, %s39, %s30
      %p41 = scmp.ge.s32.totalorder %s40, 2
      %s42 = scalar_select %p41, 0, %s40
      %s44 = sadd.s32 %s43, 1
      %p47 = scmp.eq.s32.totalorder %s23, 7
      %p48 = scmp.ne.s32.totalorder %s43, %s45
      %p49 = scmp.eq.s32.totalorder %s23, 0
      %p50 = por %p48, %p49
      %p51 = scmp.ne.s32.totalorder %s43, %s45
      %p52 = scmp.eq.s32.totalorder %s28, 7
      %p53 = por %p51, %p52
      %p54 = scmp.ne.s32.totalorder %s45, %s46
      %p55 = scmp.eq.s32.totalorder %s28, 0
      %p56 = por %p54, %p55
      %p57 = scmp.ne.s32.totalorder %s45, %s46
      %p58 = scmp.eq.s32.totalorder %s29, 7
      %p59 = por %p57, %p58
      %p61 = scmp.ne.s32.totalorder %s46, %s60
      %p62 = scmp.eq.s32.totalorder %s29, 0
      %p63 = por %p61, %p62
      %s64 = ssub.s32 %s30, %s42
      %s65 = ssub.s32 %s31, %s38
      %s66 = sor.u32 %s64, %s65
      %p67 = scmp.eq.s32.totalorder %s66, 0
      %s69 = sadd.s32 %s68, 1
      %s70 = scalar_select %p67, %s68, %s69
      %p73 = pneg %p67
      %p74 = scmp.eq.s32.totalorder %s23, 7
      %p75 = por %p73, %p74
      %p76 = scmp.ne.s32.totalorder %s68, %s71
      %p77 = scmp.eq.s32.totalorder %s23, 0
      %p78 = por %p76, %p77
      %p79 = scmp.ne.s32.totalorder %s68, %s71
      %p80 = scmp.eq.s32.totalorder %s28, 7
      %p81 = por %p79, %p80
      %p82 = scmp.ne.s32.totalorder %s71, %s72
      %p83 = scmp.eq.s32.totalorder %s28, 0
      %p84 = por %p82, %p83
      %p85 = scmp.ne.s32.totalorder %s71, %s72
      %p86 = scmp.eq.s32.totalorder %s29, 7
      %p87 = por %p85, %p86
      %p89 = scmp.ne.s32.totalorder %s72, %s88
      %p90 = scmp.eq.s32.totalorder %s29, 0
      %p91 = por %p89, %p90
      %s93 = sadd.s32 %s92, 1
      %p96 = scmp.eq.s32.totalorder %s23, 7
      %p97 = scmp.ne.s32.totalorder %s92, %s94
      %p98 = scmp.eq.s32.totalorder %s23, 0
      %p99 = por %p97, %p98
      %p100 = scmp.ne.s32.totalorder %s92, %s94
      %p101 = scmp.eq.s32.totalorder %s28, 7
      %p102 = por %p100, %p101
      %p103 = scmp.ne.s32.totalorder %s94, %s95
      %p104 = scmp.eq.s32.totalorder %s28, 0
      %p105 = por %p103, %p104
      %p106 = scmp.ne.s32.totalorder %s94, %s95
      %p107 = scmp.eq.s32.totalorder %s29, 7
      %p108 = por %p106, %p107
      %p110 = scmp.ne.s32.totalorder %s95, %s109
      %p111 = scmp.eq.s32.totalorder %s29, 0
      %p112 = por %p110, %p111
      %s114 = sadd.s32 %s113, 1
      %p117 = scmp.eq.s32.totalorder %s23, 7
      %p118 = scmp.ne.s32.totalorder %s113, %s115
      %p119 = scmp.eq.s32.totalorder %s23, 0
      %p120 = por %p118, %p119
      %p121 = scmp.ne.s32.totalorder %s113, %s115
      %p122 = scmp.eq.s32.totalorder %s28, 7
      %p123 = por %p121, %p122
      %p124 = scmp.ne.s32.totalorder %s115, %s116
      %p125 = scmp.eq.s32.totalorder %s28, 0
      %p126 = por %p124, %p125
      %p127 = scmp.ne.s32.totalorder %s115, %s116
      %p128 = scmp.eq.s32.totalorder %s29, 7
      %p129 = por %p127, %p128
      %p131 = scmp.ne.s32.totalorder %s116, %s130
      %p132 = scmp.eq.s32.totalorder %s29, 0
      %p133 = por %p131, %p132
      %s134 = ssub.s32 %s30, %s42
      %s135 = ssub.s32 %s31, %s38
      %s136 = sor.u32 %s134, %s135
      %p137 = scmp.eq.s32.totalorder %s136, 0
      %s139 = sadd.s32 %s138, 1
      %s140 = scalar_select %p137, %s138, %s139
      %p143 = pneg %p137
      %p144 = scmp.eq.s32.totalorder %s23, 7
      %p145 = por %p143, %p144
      %p146 = scmp.ne.s32.totalorder %s138, %s141
      %p147 = scmp.eq.s32.totalorder %s23, 0
      %p148 = por %p146, %p147
      %p149 = scmp.ne.s32.totalorder %s138, %s141
      %p150 = scmp.eq.s32.totalorder %s28, 7
      %p151 = por %p149, %p150
      %p152 = scmp.ne.s32.totalorder %s141, %s142
      %p153 = scmp.eq.s32.totalorder %s28, 0
      %p154 = por %p152, %p153
      %p155 = scmp.ne.s32.totalorder %s141, %s142
      %p156 = scmp.eq.s32.totalorder %s29, 7
      %p157 = por %p155, %p156
      %p159 = scmp.ne.s32.totalorder %s142, %s158
      %p160 = scmp.eq.s32.totalorder %s29, 0
      %p161 = por %p159, %p160
      %s162 = ssub.s32 %s30, %s42
      %s163 = ssub.s32 %s31, %s38
      %s164 = sor.u32 %s162, %s163
      %p165 = scmp.eq.s32.totalorder %s164, 0
      %s167 = sadd.s32 %s166, 1
      %s168 = scalar_select %p165, %s166, %s167
      %p171 = pneg %p165
      %p172 = scmp.eq.s32.totalorder %s23, 7
      %p173 = por %p171, %p172
      %p174 = scmp.ne.s32.totalorder %s166, %s169
      %p175 = scmp.eq.s32.totalorder %s23, 0
      %p176 = por %p174, %p175
      %p177 = scmp.ne.s32.totalorder %s166, %s169
      %p178 = scmp.eq.s32.totalorder %s28, 7
      %p179 = por %p177, %p178
      %p180 = scmp.ne.s32.totalorder %s169, %s170
      %p181 = scmp.eq.s32.totalorder %s28, 0
      %p182 = por %p180, %p181
      %p183 = scmp.ne.s32.totalorder %s169, %s170
      %p184 = scmp.eq.s32.totalorder %s29, 7
      %p185 = por %p183, %p184
      %p187 = scmp.ne.s32.totalorder %s170, %s186
      %p188 = scmp.eq.s32.totalorder %s29, 0
      %p189 = por %p187, %p188
      %p190 = scmp.le.s32.totalorder 1, %s23
      %p191 = scmp.lt.s32.totalorder %s23, 9
      %p192 = pnand %p190, %p191
      %p193 = pneg %p192
      // Predicated region
      $region9: #{tpu_custom_call.1} parent=5 // pred_check
        _
      $region10: #{tpu_custom_call.1} parent=5 // pred_check_branch
        %195 = sbr.rel (%p192) target = $region12
      $region11: #{tpu_custom_call.1} parent=5 // pred_region
        %s196 = ssub.s32 %s23, 1
        // Predicated region
        $region13: #{tpu_custom_call.1} parent=11 // pred_check
          %p197 = pneg %p56
        $region14: #{tpu_custom_call.1} parent=11 // pred_check_branch
          %199 = sbr.rel (%p197) target = $region16
        $region15: #{tpu_custom_call.1} parent=11 // pred_region
          _
        $region16: #{tpu_custom_call.1} parent=11 // pred_fallthru
          _
        // Predicated region
        $region17: #{tpu_custom_call.1} parent=11 // pred_check
          %p200 = pneg %p105
        $region18: #{tpu_custom_call.1} parent=11 // pred_check_branch
          %202 = sbr.rel (%p200) target = $region20
        $region19: #{tpu_custom_call.1} parent=11 // pred_region
          %s204 = ssub.s32 2048, 2048
          %205 = vsyncadd [#allocation7], %s204
          %s206 = sshll.u32 [#allocation6], 4
          %s207 = int_to_ptr.vmem [resolvable:$true] %s206
          %212 = dma.hbm_to_vmem [thread:$0]  %s2, 2048, %s207, [#allocation7], 128, 128, 8
        $region20: #{tpu_custom_call.1} parent=11 // pred_fallthru
          _
        // Predicated region
        $region21: #{tpu_custom_call.1} parent=11 // pred_check
          %p213 = pneg %p126
        $region22: #{tpu_custom_call.1} parent=11 // pred_check_branch
          %215 = sbr.rel (%p213) target = $region24
        $region23: #{tpu_custom_call.1} parent=11 // pred_region
          _
        $region24: #{tpu_custom_call.1} parent=11 // pred_fallthru
          _
      $region12: #{tpu_custom_call.1} parent=5 // pred_fallthru
        _
      %p216 = scmp.lt.s32.totalorder %s23, 8
      // Predicated region
      $region25: #{tpu_custom_call.1} parent=5 // pred_check
        %p217 = pneg %p216
      $region26: #{tpu_custom_call.1} parent=5 // pred_check_branch
        %219 = sbr.rel (%p217) target = $region28
      $region27: #{tpu_custom_call.1} parent=5 // pred_region
        // Predicated region
        $region29: #{tpu_custom_call.1} parent=27 // pred_check
          %p220 = pneg %p78
        $region30: #{tpu_custom_call.1} parent=27 // pred_check_branch
          %222 = sbr.rel (%p220) target = $region32
        $region31: #{tpu_custom_call.1} parent=27 // pred_region
          %s223 = sand.u32 %s68, 1
          %s224 = scalar_lea.sflag [#allocation4], %s223
          %s225 = sand.u32 %s68, 1
          %s226 = smul.addr %s225, 16
          %s227 = scalar_lea.vmem [#allocation3], %s226
          %s228 = smul.u32 2, %s31
          %s230 = ssub.s32 256, 256
          %231 = vsyncadd %s224, %s230
          %s232 = smul.addr %s30, 8
          %s233 = sadd.s32 %s228, %s232
          %s234 = smul.addr %s233, 128
          %s235 = scalar_lea.hbm %s1, %s234
          %s236 = sshll.u32 %s227, 4
          %s237 = int_to_ptr.vmem [resolvable:$true] %s236
          %242 = dma.hbm_to_vmem [thread:$0]  %s235, 256, %s237, %s224, 128, 128, 8
        $region32: #{tpu_custom_call.1} parent=27 // pred_fallthru
          _
      $region28: #{tpu_custom_call.1} parent=5 // pred_fallthru
        _
      %p243 = scmp.le.s32.totalorder 1, %s23
      %p244 = scmp.lt.s32.totalorder %s23, 9
      %p245 = pnand %p243, %p244
      %p246 = pneg %p245
      // Predicated region
      $region33: #{tpu_custom_call.1} parent=5 // pred_check
        _
      $region34: #{tpu_custom_call.1} parent=5 // pred_check_branch
        %248 = sbr.rel (%p245) target = $region36
      $region35: #{tpu_custom_call.1} parent=5 // pred_region
        %s249 = ssub.s32 %s23, 1
        %s250 = sand.u32 %s71, 1
        %s251 = scalar_lea.sflag [#allocation4], %s250
        %s252 = sand.u32 %s71, 1
        %s253 = smul.addr %s252, 16
        %s254 = scalar_lea.vmem [#allocation3], %s253
        // Predicated region
        $region37: #{tpu_custom_call.1} parent=35 // pred_check
          %p255 = pneg %p84
        $region38: #{tpu_custom_call.1} parent=35 // pred_check_branch
          %257 = sbr.rel (%p255) target = $region40
        $region39: #{tpu_custom_call.1} parent=35 // pred_region
          %258 = dma.done %s251, 256
        $region40: #{tpu_custom_call.1} parent=35 // pred_fallthru
          _
        // Predicated region
        $region41: #{tpu_custom_call.1} parent=35 // pred_check
          %p259 = pneg %p105
        $region42: #{tpu_custom_call.1} parent=35 // pred_check_branch
          %261 = sbr.rel (%p259) target = $region44
        $region43: #{tpu_custom_call.1} parent=35 // pred_region
          %262 = dma.done [#allocation7], 2048
        $region44: #{tpu_custom_call.1} parent=35 // pred_fallthru
          _
        %p263 = pneg %p56
        %p264 = pneg %p53
        %s265 = sand.u32 %s71, 1
        %s266 = scalar_lea.sflag [#allocation4], %s265
        %s267 = sand.u32 %s71, 1
        %s268 = smul.addr %s267, 16
        %s269 = scalar_lea.vmem [#allocation3], %s268
        %p270 = pneg %p84
        %p271 = pneg %p81
        %p272 = pneg %p105
        %p273 = pneg %p102
        %p274 = pneg %p126
        %p275 = pneg %p123
        %p276 = pneg %p154
        %p277 = pneg %p151
        %s278 = sand.u32 %s141, 1
        %s279 = scalar_lea.sflag [#allocation5], %s278
        %s280 = sand.u32 %s141, 1
        %s281 = scalar_lea.vmem [#allocation8], %s280
        %p282 = pneg %p182
        %p283 = pneg %p179
        %s284 = sand.u32 %s169, 1
        %s285 = scalar_lea.sflag [#allocation10], %s284
        %s286 = sand.u32 %s169, 1
        %s287 = scalar_lea.vmem [#allocation9], %s286
        %s288 = smul.u32 2, %s33
        %v289 = vld [vmem:[%s254] sm:$0xff]
        %v290 = vld [vmem:[%s254 + $0x8] sm:$0xff]
        %v291 = vld [vmem:[#allocation6] sm:$0xff]
        %v292 = vld [vmem:[#allocation6 + $0x8] sm:$0xff]
        %v293 = vld [vmem:[#allocation6 + $0x10] sm:$0xff]
        %v294 = vld [vmem:[#allocation6 + $0x18] sm:$0xff]
        %v295 = vld [vmem:[#allocation6 + $0x20] sm:$0xff]
        %v296 = vld [vmem:[#allocation6 + $0x28] sm:$0xff]
        %v297 = vld [vmem:[#allocation6 + $0x30] sm:$0xff]
        %v298 = vld [vmem:[#allocation6 + $0x38] sm:$0xff]
        %v299 = vld [vmem:[#allocation6 + $0x40] sm:$0xff]
        %v300 = vld [vmem:[#allocation6 + $0x48] sm:$0xff]
        %v301 = vld [vmem:[#allocation6 + $0x50] sm:$0xff]
        %v302 = vld [vmem:[#allocation6 + $0x58] sm:$0xff]
        %v303 = vld [vmem:[#allocation6 + $0x60] sm:$0xff]
        %v304 = vld [vmem:[#allocation6 + $0x68] sm:$0xff]
        %v305 = vld [vmem:[#allocation6 + $0x70] sm:$0xff]
        %v306 = vld [vmem:[#allocation6 + $0x78] sm:$0xff]
        %v307 = vld [vmem:[%s3] sm:$0x1]
        %v309 = vlaneseq
        %v310 = vshrl.u32 %v309, 7
        %v311 = vsub.s32 0, %v310
        %v312 = vrot.slane %v307, %v311
        %314 = vmatprep.subr.mxu0 0.0
        %315 = vmatpush1.msra.mxu0 %v306
        %316 = vmatprep.subr.mxu0 0.0
        %317 = vmatpush1.msra.mxu0 %v305
        %318 = vmatprep.subr.mxu0 0.0
        %319 = vmatpush1.msra.mxu0 %v304
        %320 = vmatprep.subr.mxu0 0.0
        %321 = vmatpush1.msra.mxu0 %v303
        %322 = vmatprep.subr.mxu0 0.0
        %323 = vmatpush1.msra.mxu0 %v302
        %324 = vmatprep.subr.mxu0 0.0
        %325 = vmatpush1.msra.mxu0 %v301
        %326 = vmatprep.subr.mxu0 0.0
        %327 = vmatpush1.msra.mxu0 %v300
        %328 = vmatprep.subr.mxu0 0.0
        %329 = vmatpush1.msra.mxu0 %v299
        %330 = vmatprep.subr.mxu0 0.0
        %331 = vmatpush1.msra.mxu0 %v298
        %332 = vmatprep.subr.mxu0 0.0
        %333 = vmatpush1.msra.mxu0 %v297
        %334 = vmatprep.subr.mxu0 0.0
        %335 = vmatpush1.msra.mxu0 %v296
        %336 = vmatprep.subr.mxu0 0.0
        %337 = vmatpush1.msra.mxu0 %v295
        %338 = vmatprep.subr.mxu0 0.0
        %339 = vmatpush1.msra.mxu0 %v294
        %340 = vmatprep.subr.mxu0 0.0
        %341 = vmatpush1.msra.mxu0 %v293
        %342 = vmatprep.subr.mxu0 0.0
        %343 = vmatpush1.msra.mxu0 %v292
        %344 = vmatprep.subr.mxu0 0.0
        %345 = vmatpush1.msra.mxu0 %v291
        %346 = vmatprep.subr.mxu0 0.0
        %347 = vmatpush2.msra.mxu0 0.0
        %348 = vmatprep.subr.mxu0 0.0
        %349 = vmatpush2.msra.mxu0 0.0
        %350 = vmatprep.subr.mxu0 0.0
        %351 = vmatpush2.msra.mxu0 0.0
        %352 = vmatprep.subr.mxu0 0.0
        %353 = vmatpush2.msra.mxu0 0.0
        %354 = vmatprep.subr.mxu0 0.0
        %355 = vmatpush2.msra.mxu0 0.0
        %356 = vmatprep.subr.mxu0 0.0
        %357 = vmatpush2.msra.mxu0 0.0
        %358 = vmatprep.subr.mxu0 0.0
        %359 = vmatpush2.msra.mxu0 0.0
        %360 = vmatprep.subr.mxu0 0.0
        %361 = vmatpush2.msra.mxu0 0.0
        %362 = vmatprep.subr.mxu0 0.0
        %363 = vmatpush2.msra.mxu0 0.0
        %364 = vmatprep.subr.mxu0 0.0
        %365 = vmatpush2.msra.mxu0 0.0
        %366 = vmatprep.subr.mxu0 0.0
        %367 = vmatpush2.msra.mxu0 0.0
        %368 = vmatprep.subr.mxu0 0.0
        %369 = vmatpush2.msra.mxu0 0.0
        %370 = vmatprep.subr.mxu0 0.0
        %371 = vmatpush2.msra.mxu0 0.0
        %372 = vmatprep.subr.mxu0 0.0
        %373 = vmatpush2.msra.mxu0 0.0
        %374 = vmatprep.subr.mxu0 0.0
        %375 = vmatpush2.msra.mxu0 0.0
        %376 = vmatprep.subr.mxu0 0.0
        %377 = vmatpush2.msra.mxu0 0.0
        %378 = vmatprep.mubr.f32.mxu0 0.0
        %379 = vmatmul.mubr.f32.gmra.mxu0 %v289
        %v380 = vpop.f32.mrf.mxu0
        %v381 = vadd.f32 %v312, %v380
        %v382 = vpop.f32.mrf.mxu0
        %383 = vmatprep.mubr.f32.mxu0 0.0
        %384 = vmatmul.mubr.f32.gmra.mxu0 %v290
        %v385 = vpop.f32.mrf.mxu0
        %v386 = vadd.f32 %v312, %v385
        %v387 = vpop.f32.mrf.mxu0
        %388 = vdwg.mxu0
        %s389 = sld [smem:[#allocation2]]
        %vm390 = vcmp.ge.f32.partialorder %v381, 0.0
        %vm391 = vcmp.ge.f32.partialorder %v386, 0.0
        %v392 = vstv %s389
        %v393 = vmul.f32 %v392, %v381
        %v394 = vmul.f32 %v392, %v386
        %v395 = vsel %vm390, %v381, %v393
        %v396 = vsel %vm391, %v386, %v394
        %v397 = vlaneseq
        %v398 = vshrl.u32 %v397, 7
        %v399 = vadd.s32 %v398, 8
        %s400 = smul.u32 %s33, 16
        %v401 = vstv %s400
        %v402 = vadd.s32 %v401, %v398
        %v403 = vadd.s32 %v401, %v399
        %vm404 = vcmp.lt.s32.totalorder %v402, 64
        %vm405 = vcmp.lt.s32.totalorder %v403, 64
        %v406 = vsel %vm404, 1, 0
        %v407 = vsel %vm405, 1, 0
        %vm408 = vcmp.eq.s32.totalorder %v406, 1
        %vm409 = vcmp.eq.s32.totalorder %v407, 1
        %v410 = vsel %vm408, %v395, 0.0
        %v411 = vsel %vm409, %v396, 0.0
        %v412 = vadd.f32 %v410, %v411
        %v413 = vrot.slane %v412, 4
        %v414 = vadd.f32 %v412, %v413
        %v415 = vrot.slane %v414, 2
        %v416 = vadd.f32 %v414, %v415
        %v417 = vrot.slane %v416, 1
        %v418 = vadd.f32 %v416, %v417
        %419 = vst [vmem:[%s281] sm:$0x1] %v418
        %v420 = vmul.f32 %v410, %v410
        %v421 = vmul.f32 %v411, %v411
        %v422 = vadd.f32 %v420, %v421
        %v423 = vrot.slane %v422, 4
        %v424 = vadd.f32 %v422, %v423
        %v425 = vrot.slane %v424, 2
        %v426 = vadd.f32 %v424, %v425
        %v427 = vrot.slane %v426, 1
        %v428 = vadd.f32 %v426, %v427
        %429 = vst [vmem:[%s287] sm:$0x1] %v428
        %s430 = sand.u32 %s141, 1
        %s431 = scalar_lea.sflag [#allocation5], %s430
        %s432 = sand.u32 %s141, 1
        %s433 = scalar_lea.vmem [#allocation8], %s432
        %s434 = sand.u32 %s169, 1
        %s435 = scalar_lea.sflag [#allocation10], %s434
        %s436 = sand.u32 %s169, 1
        %s437 = scalar_lea.vmem [#allocation9], %s436
        // Predicated region
        $region45: #{tpu_custom_call.1} parent=35 // pred_check
          %p438 = pneg %p151
        $region46: #{tpu_custom_call.1} parent=35 // pred_check_branch
          %440 = sbr.rel (%p438) target = $region48
        $region47: #{tpu_custom_call.1} parent=35 // pred_region
          %s442 = ssub.s32 16, 16
          %443 = vsyncadd %s431, %s442
          %s444 = smul.addr %s32, 4
          %s445 = sadd.s32 %s33, %s444
          %s446 = smul.addr %s445, 16
          %s447 = scalar_lea.hbm %s4, %s446
          %s449 = sshll.u32 %s433, 4
          %s450 = int_to_ptr.vmem [resolvable:$true] %s449
          %452 = dma.vmem_to_hbm [thread:$0]  %s450, 16, %s447, %s431
        $region48: #{tpu_custom_call.1} parent=35 // pred_fallthru
          _
        // Predicated region
        $region49: #{tpu_custom_call.1} parent=35 // pred_check
          %p453 = pneg %p179
        $region50: #{tpu_custom_call.1} parent=35 // pred_check_branch
          %455 = sbr.rel (%p453) target = $region52
        $region51: #{tpu_custom_call.1} parent=35 // pred_region
          %s457 = ssub.s32 16, 16
          %458 = vsyncadd %s435, %s457
          %s459 = smul.addr %s32, 4
          %s460 = sadd.s32 %s33, %s459
          %s461 = smul.addr %s460, 16
          %s462 = scalar_lea.hbm %s5, %s461
          %s464 = sshll.u32 %s437, 4
          %s465 = int_to_ptr.vmem [resolvable:$true] %s464
          %467 = dma.vmem_to_hbm [thread:$0]  %s465, 16, %s462, %s435
        $region52: #{tpu_custom_call.1} parent=35 // pred_fallthru
          _
      $region36: #{tpu_custom_call.1} parent=5 // pred_fallthru
        _
      %p468 = scmp.le.s32.totalorder 2, %s23
      // Predicated region
      $region53: #{tpu_custom_call.1} parent=5 // pred_check
        %p469 = pneg %p468
      $region54: #{tpu_custom_call.1} parent=5 // pred_check_branch
        %471 = sbr.rel (%p469) target = $region56
      $region55: #{tpu_custom_call.1} parent=5 // pred_region
        %s472 = ssub.s32 %s23, 2
        // Predicated region
        $region57: #{tpu_custom_call.1} parent=55 // pred_check
          %p473 = pneg %p157
        $region58: #{tpu_custom_call.1} parent=55 // pred_check_branch
          %475 = sbr.rel (%p473) target = $region60
        $region59: #{tpu_custom_call.1} parent=55 // pred_region
          %s476 = sand.u32 %s142, 1
          %s477 = scalar_lea.sflag [#allocation5], %s476
          %s478 = sand.u32 %s142, 1
          %s479 = scalar_lea.vmem [#allocation8], %s478
          %480 = dma.done %s477, 16
        $region60: #{tpu_custom_call.1} parent=55 // pred_fallthru
          _
        // Predicated region
        $region61: #{tpu_custom_call.1} parent=55 // pred_check
          %p481 = pneg %p185
        $region62: #{tpu_custom_call.1} parent=55 // pred_check_branch
          %483 = sbr.rel (%p481) target = $region64
        $region63: #{tpu_custom_call.1} parent=55 // pred_region
          %s484 = sand.u32 %s170, 1
          %s485 = scalar_lea.sflag [#allocation10], %s484
          %s486 = sand.u32 %s170, 1
          %s487 = scalar_lea.vmem [#allocation9], %s486
          %488 = dma.done %s485, 16
        $region64: #{tpu_custom_call.1} parent=55 // pred_fallthru
          _
      $region56: #{tpu_custom_call.1} parent=5 // pred_fallthru
        _
    $region6: #{tpu_custom_call.1} parent=1 // loop_footer
      %s27 = sadd.s32 1, %s23
    $region7: #{tpu_custom_call.1} parent=1 // loop_footer_branch
      %22 = sbr.rel target = $region3
    $region8: #{tpu_custom_call.1} parent=1 // loop_exit
      _
    %489 = vsyncpa [#allocation4], 1
    %s490 = scalar_lea.sflag [#allocation4], 1
    %491 = vsyncpa %s490, 1
    %492 = vsyncpa [#allocation7], 1
    %493 = vsyncpa [#allocation5], 1
    %s494 = scalar_lea.sflag [#allocation5], 1
    %495 = vsyncpa %s494, 1
    %496 = vsyncpa [#allocation10], 1
    %s497 = scalar_lea.sflag [#allocation10], 1
    %498 = vsyncpa %s497, 1

</llo_original>
